<compile_context>
chip_gen: v6e
topology: v6e:2x2x1
jax: 0.10.0
libtpu: 0.0.40
codegen_flags: <defaults>
</compile_context>

<pallas_src>
import functools

import jax
import jax.numpy as jnp
from jax.experimental import pallas as pl
from jax.experimental.pallas import tpu as pltpu

_LANES = 128


def _project3d_kernel(p_ref, pts_ref, pix_ref, z_ref, *, eps, width, height):
    # p_ref  : SMEM (B*12,)          rows of P = (K@T)[:, :3, :], row-major
    # pts_ref: VMEM (1, 4, R, 128)   homogeneous points (x, y, z, 1)
    # pix_ref: VMEM (1, 2, R, 128)   normalized pixel coords (u, v)
    # z_ref  : VMEM (1, 1, R, 128)   depth (cam z + eps)
    b = pl.program_id(0)
    base = b * 12

    # (R, 128) planes -> fully dense f32 vregs.
    x = pts_ref[0, 0]
    y = pts_ref[0, 1]
    zc = pts_ref[0, 2]
    w = pts_ref[0, 3]

    def cam_row(i):
        # Scalar (SMEM) * vector broadcast on the VPU; K=4 contraction.
        o = base + 4 * i
        return (p_ref[o] * x
                + p_ref[o + 1] * y
                + p_ref[o + 2] * zc
                + p_ref[o + 3] * w)

    cam_x = cam_row(0)
    cam_y = cam_row(1)
    cam_z = cam_row(2) + eps

    # One exact reciprocal shared by u and v; fold /(W-1), -0.5, *2 into a
    # single precomputed scale and a -1 offset.
    inv_z = pl.reciprocal(cam_z)                    # exact (1e-4 pix tolerance)
    sx = 2.0 / (width - 1.0)
    sy = 2.0 / (height - 1.0)
    u = cam_x * inv_z * sx - 1.0
    v = cam_y * inv_z * sy - 1.0

    pix_ref[0, 0] = u.astype(pix_ref.dtype)
    pix_ref[0, 1] = v.astype(pix_ref.dtype)
    z_ref[0, 0] = cam_z.astype(z_ref.dtype)


def _choose_tiling(hw, batch):
    """Returns (rows_per_block, n_blocks, padded_rows)."""
    r_total = -(-hw // _LANES)                      # ceil(HW / 128)
    target_rows = 1024                              # ~2 MiB of points per step
    n_blocks = max(1, -(-r_total // target_rows))
    # On v7x keep >=2 parallel grid steps even for B == 1.
    if batch * n_blocks < 2 and r_total >= 16:
        n_blocks = 2
    rows = -(-r_total // n_blocks)
    rows = -(-rows // 8) * 8                        # sublane multiple of 8
    return rows, n_blocks, rows * n_blocks


def project_3d(points, K, T, height, width, eps=1e-7):
    """Forward pass equivalent to the PyTorch Project3D module.

    points: (B, 4, H*W) float32 homogeneous 3D points
    K, T:   (B, 4, 4)   float32 intrinsics / pose
    returns: (pix_coords (B, H, W, 2), z (B, 1, H, W))
    """
    B, four, HW = points.shape
    assert four == 4 and HW == height * width
    out_dtype = points.dtype

    # Glue: tiny 4x4 matmul + slice, flattened 1-D for SMEM scalar access.
    P = jnp.matmul(K, T)[:, :3, :].reshape(B * 12).astype(jnp.float32)

    rows, n_blocks, r_total_pad = _choose_tiling(HW, B)
    hw_pad = r_total_pad * _LANES

    pts = points.astype(jnp.float32)
    if hw_pad != HW:
        # Zero padding is safe: cam_z = eps > 0, so no inf/NaN; sliced off below.
        pts = jnp.pad(pts, ((0, 0), (0, 0), (0, hw_pad - HW)))
    pts = pts.reshape(B, 4, r_total_pad, _LANES)

    grid = (B, n_blocks)

    pix_pad, z_pad = pl.pallas_call(
        functools.partial(_project3d_kernel, eps=float(eps),
                          width=float(width), height=float(height)),
        out_shape=(
            jax.ShapeDtypeStruct((B, 2, r_total_pad, _LANES), out_dtype),
            jax.ShapeDtypeStruct((B, 1, r_total_pad, _LANES), out_dtype),
        ),
        grid_spec=pltpu.PrefetchScalarGridSpec(
            num_scalar_prefetch=0,
            grid=grid,
            in_specs=[
                pl.BlockSpec(memory_space=pltpu.MemorySpace.SMEM),          # P (B*12,)
                pl.BlockSpec((1, 4, rows, _LANES), lambda b, t: (b, 0, t, 0)),
            ],
            out_specs=[
                pl.BlockSpec((1, 2, rows, _LANES), lambda b, t: (b, 0, t, 0)),
                pl.BlockSpec((1, 1, rows, _LANES), lambda b, t: (b, 0, t, 0)),
            ],
        ),
        compiler_params=pltpu.CompilerParams(
            dimension_semantics=("parallel", "parallel"),
        ),
    )(P, pts)

    # Glue: strip padding and restore the PyTorch output convention.
    # TODO(synk): the (B,2,H,W)->(B,H,W,2) permute is an extra HBM pass; fuse
    # into the downstream grid-sample consumer if possible.
    pix_flat = pix_pad.reshape(B, 2, hw_pad)[:, :, :HW]
    z_flat = z_pad.reshape(B, 1, hw_pad)[:, :, :HW]
    pix_coords = pix_flat.reshape(B, 2, height, width).transpose(0, 2, 3, 1)
    z = z_flat.reshape(B, 1, height, width)
    return pix_coords, z


if __name__ == "__main__":
    B, H, W = 2, 16, 16
    HW = H * W
    eps = 1e-7

    key = jax.random.PRNGKey(0)
    k1, k2, k3 = jax.random.split(key, 3)

    # Homogeneous 3D points: x, y ~ N(0,1), depth in [1, 5], w = 1.
    xy = jax.random.normal(k1, (B, 2, HW), jnp.float32)
    depth = jax.random.uniform(k2, (B, 1, HW), jnp.float32, 1.0, 5.0)
    ones = jnp.ones((B, 1, HW), jnp.float32)
    points = jnp.concatenate([xy, depth, ones], axis=1)          # (B, 4, HW)

    # Intrinsics K (shared) and per-batch pose T = I + small translation.
    K = jnp.tile(jnp.array([[0.58 * W, 0.0, 0.5 * W, 0.0],
                            [0.0, 1.92 * H, 0.5 * H, 0.0],
                            [0.0, 0.0, 1.0, 0.0],
                            [0.0, 0.0, 0.0, 1.0]], jnp.float32)[None], (B, 1, 1))
    trans = 0.1 * jax.random.normal(k3, (B, 3), jnp.float32)
    T = jnp.tile(jnp.eye(4, dtype=jnp.float32)[None], (B, 1, 1))
    T = T.at[:, :3, 3].set(trans)

    pix, z = project_3d(points, K, T, H, W, eps=eps)
    pix, z = jax.block_until_ready((pix, z))

    # Pure-JAX reference replicating the PyTorch forward.
    P_ref = jnp.matmul(K, T)[:, :3, :]
    cam = jnp.matmul(P_ref, points)
    z_ref = cam[:, 2:3, :] + eps
    pix_ref = cam[:, :2, :] / z_ref
    pix_ref = pix_ref.reshape(B, 2, H, W).transpose(0, 2, 3, 1)
    pix_ref = pix_ref / jnp.array([W - 1, H - 1], jnp.float32)
    pix_ref = (pix_ref - 0.5) * 2.0
    z_ref = z_ref.reshape(B, 1, H, W)

    assert pix.shape == (B, H, W, 2) and z.shape == (B, 1, H, W)
    assert jnp.allclose(pix, pix_ref, atol=1e-4, rtol=1e-4), \
        float(jnp.max(jnp.abs(pix - pix_ref)))
    assert jnp.allclose(z, z_ref, atol=1e-5, rtol=1e-5), \
        float(jnp.max(jnp.abs(z - z_ref)))

    print("KERNEL_OK")
</pallas_src>

<mosaic_0001>
module attributes {stable_mosaic.version = 11 : i64} {
  func.func @_project3d_kernel(%arg0: i32, %arg1: i32, %arg2: memref<24xf32, #tpu.memory_space<smem>>, %arg3: memref<1x4x8x128xf32, #tpu.memory_space<vmem>>, %arg4: memref<1x2x8x128xf32, #tpu.memory_space<vmem>>, %arg5: memref<1x1x8x128xf32, #tpu.memory_space<vmem>>) attributes {dimension_semantics = [#tpu.dimension_semantics<parallel>, #tpu.dimension_semantics<parallel>], iteration_bounds = array<i64: 2, 1>, scalar_prefetch = 0 : i64, scratch_operands = 0 : i64, tpu.core_type = #tpu.core_type<tc>, window_params = [{transform_indices = @transform_0, window_bounds = array<i64: 24>}, {transform_indices = @transform_1, window_bounds = array<i64: 1, 4, 8, 128>}, {transform_indices = @transform_2, window_bounds = array<i64: 1, 2, 8, 128>}, {transform_indices = @transform_3, window_bounds = array<i64: 1, 1, 8, 128>}]} {
    %c12_i32 = arith.constant 12 : i32
    %0 = arith.muli %arg0, %c12_i32 : i32
    %c0 = arith.constant 0 : index
    %c0_0 = arith.constant 0 : index
    %c0_1 = arith.constant 0 : index
    %c0_2 = arith.constant 0 : index
    %1 = vector.load %arg3[%c0, %c0_0, %c0_1, %c0_2] : memref<1x4x8x128xf32, #tpu.memory_space<vmem>>, vector<1x1x8x128xf32>
    %2 = vector.shape_cast %1 : vector<1x1x8x128xf32> to vector<8x128xf32>
    %c0_3 = arith.constant 0 : index
    %c1 = arith.constant 1 : index
    %c0_4 = arith.constant 0 : index
    %c0_5 = arith.constant 0 : index
    %3 = vector.load %arg3[%c0_3, %c1, %c0_4, %c0_5] : memref<1x4x8x128xf32, #tpu.memory_space<vmem>>, vector<1x1x8x128xf32>
    %4 = vector.shape_cast %3 : vector<1x1x8x128xf32> to vector<8x128xf32>
    %c0_6 = arith.constant 0 : index
    %c2 = arith.constant 2 : index
    %c0_7 = arith.constant 0 : index
    %c0_8 = arith.constant 0 : index
    %5 = vector.load %arg3[%c0_6, %c2, %c0_7, %c0_8] : memref<1x4x8x128xf32, #tpu.memory_space<vmem>>, vector<1x1x8x128xf32>
    %6 = vector.shape_cast %5 : vector<1x1x8x128xf32> to vector<8x128xf32>
    %c0_9 = arith.constant 0 : index
    %c3 = arith.constant 3 : index
    %c0_10 = arith.constant 0 : index
    %c0_11 = arith.constant 0 : index
    %7 = vector.load %arg3[%c0_9, %c3, %c0_10, %c0_11] : memref<1x4x8x128xf32, #tpu.memory_space<vmem>>, vector<1x1x8x128xf32>
    %8 = vector.shape_cast %7 : vector<1x1x8x128xf32> to vector<8x128xf32>
    %c0_i32 = arith.constant 0 : i32
    %9 = arith.addi %0, %c0_i32 : i32
    %10 = arith.index_cast %9 : i32 to index
    %11 = memref.load %arg2[%10] : memref<24xf32, #tpu.memory_space<smem>>
    %12 = vector.broadcast %11 : f32 to vector<8x128xf32>
    %13 = arith.mulf %12, %2 : vector<8x128xf32>
    %c1_i32 = arith.constant 1 : i32
    %14 = arith.addi %9, %c1_i32 : i32
    %15 = arith.index_cast %14 : i32 to index
    %16 = memref.load %arg2[%15] : memref<24xf32, #tpu.memory_space<smem>>
    %17 = vector.broadcast %16 : f32 to vector<8x128xf32>
    %18 = arith.mulf %17, %4 : vector<8x128xf32>
    %19 = arith.addf %13, %18 : vector<8x128xf32>
    %c2_i32 = arith.constant 2 : i32
    %20 = arith.addi %9, %c2_i32 : i32
    %21 = arith.index_cast %20 : i32 to index
    %22 = memref.load %arg2[%21] : memref<24xf32, #tpu.memory_space<smem>>
    %23 = vector.broadcast %22 : f32 to vector<8x128xf32>
    %24 = arith.mulf %23, %6 : vector<8x128xf32>
    %25 = arith.addf %19, %24 : vector<8x128xf32>
    %c3_i32 = arith.constant 3 : i32
    %26 = arith.addi %9, %c3_i32 : i32
    %27 = arith.index_cast %26 : i32 to index
    %28 = memref.load %arg2[%27] : memref<24xf32, #tpu.memory_space<smem>>
    %29 = vector.broadcast %28 : f32 to vector<8x128xf32>
    %30 = arith.mulf %29, %8 : vector<8x128xf32>
    %31 = arith.addf %25, %30 : vector<8x128xf32>
    %c4_i32 = arith.constant 4 : i32
    %32 = arith.addi %0, %c4_i32 : i32
    %33 = arith.index_cast %32 : i32 to index
    %34 = memref.load %arg2[%33] : memref<24xf32, #tpu.memory_space<smem>>
    %35 = vector.broadcast %34 : f32 to vector<8x128xf32>
    %36 = arith.mulf %35, %2 : vector<8x128xf32>
    %c1_i32_12 = arith.constant 1 : i32
    %37 = arith.addi %32, %c1_i32_12 : i32
    %38 = arith.index_cast %37 : i32 to index
    %39 = memref.load %arg2[%38] : memref<24xf32, #tpu.memory_space<smem>>
    %40 = vector.broadcast %39 : f32 to vector<8x128xf32>
    %41 = arith.mulf %40, %4 : vector<8x128xf32>
    %42 = arith.addf %36, %41 : vector<8x128xf32>
    %c2_i32_13 = arith.constant 2 : i32
    %43 = arith.addi %32, %c2_i32_13 : i32
    %44 = arith.index_cast %43 : i32 to index
    %45 = memref.load %arg2[%44] : memref<24xf32, #tpu.memory_space<smem>>
    %46 = vector.broadcast %45 : f32 to vector<8x128xf32>
    %47 = arith.mulf %46, %6 : vector<8x128xf32>
    %48 = arith.addf %42, %47 : vector<8x128xf32>
    %c3_i32_14 = arith.constant 3 : i32
    %49 = arith.addi %32, %c3_i32_14 : i32
    %50 = arith.index_cast %49 : i32 to index
    %51 = memref.load %arg2[%50] : memref<24xf32, #tpu.memory_space<smem>>
    %52 = vector.broadcast %51 : f32 to vector<8x128xf32>
    %53 = arith.mulf %52, %8 : vector<8x128xf32>
    %54 = arith.addf %48, %53 : vector<8x128xf32>
    %c8_i32 = arith.constant 8 : i32
    %55 = arith.addi %0, %c8_i32 : i32
    %56 = arith.index_cast %55 : i32 to index
    %57 = memref.load %arg2[%56] : memref<24xf32, #tpu.memory_space<smem>>
    %58 = vector.broadcast %57 : f32 to vector<8x128xf32>
    %59 = arith.mulf %58, %2 : vector<8x128xf32>
    %c1_i32_15 = arith.constant 1 : i32
    %60 = arith.addi %55, %c1_i32_15 : i32
    %61 = arith.index_cast %60 : i32 to index
    %62 = memref.load %arg2[%61] : memref<24xf32, #tpu.memory_space<smem>>
    %63 = vector.broadcast %62 : f32 to vector<8x128xf32>
    %64 = arith.mulf %63, %4 : vector<8x128xf32>
    %65 = arith.addf %59, %64 : vector<8x128xf32>
    %c2_i32_16 = arith.constant 2 : i32
    %66 = arith.addi %55, %c2_i32_16 : i32
    %67 = arith.index_cast %66 : i32 to index
    %68 = memref.load %arg2[%67] : memref<24xf32, #tpu.memory_space<smem>>
    %69 = vector.broadcast %68 : f32 to vector<8x128xf32>
    %70 = arith.mulf %69, %6 : vector<8x128xf32>
    %71 = arith.addf %65, %70 : vector<8x128xf32>
    %c3_i32_17 = arith.constant 3 : i32
    %72 = arith.addi %55, %c3_i32_17 : i32
    %73 = arith.index_cast %72 : i32 to index
    %74 = memref.load %arg2[%73] : memref<24xf32, #tpu.memory_space<smem>>
    %75 = vector.broadcast %74 : f32 to vector<8x128xf32>
    %76 = arith.mulf %75, %8 : vector<8x128xf32>
    %77 = arith.addf %71, %76 : vector<8x128xf32>
    %cst = arith.constant 1.000000e-07 : f32
    %78 = vector.broadcast %cst : f32 to vector<8x128xf32>
    %79 = arith.addf %77, %78 : vector<8x128xf32>
    %80 = tpu.reciprocal %79 : vector<8x128xf32> -> vector<8x128xf32>
    %81 = arith.mulf %31, %80 : vector<8x128xf32>
    %cst_18 = arith.constant 0.13333334 : f32
    %82 = vector.broadcast %cst_18 : f32 to vector<8x128xf32>
    %83 = arith.mulf %81, %82 : vector<8x128xf32>
    %cst_19 = arith.constant 1.000000e+00 : f32
    %84 = vector.broadcast %cst_19 : f32 to vector<8x128xf32>
    %85 = arith.subf %83, %84 : vector<8x128xf32>
    %86 = arith.mulf %54, %80 : vector<8x128xf32>
    %cst_20 = arith.constant 0.13333334 : f32
    %87 = vector.broadcast %cst_20 : f32 to vector<8x128xf32>
    %88 = arith.mulf %86, %87 : vector<8x128xf32>
    %cst_21 = arith.constant 1.000000e+00 : f32
    %89 = vector.broadcast %cst_21 : f32 to vector<8x128xf32>
    %90 = arith.subf %88, %89 : vector<8x128xf32>
    %c0_22 = arith.constant 0 : index
    %c0_23 = arith.constant 0 : index
    %c0_24 = arith.constant 0 : index
    %c0_25 = arith.constant 0 : index
    %91 = vector.load %arg4[%c0_22, %c0_23, %c0_24, %c0_25] : memref<1x2x8x128xf32, #tpu.memory_space<vmem>>, vector<1x1x8x128xf32>
    %92 = vector.shape_cast %91 : vector<1x1x8x128xf32> to vector<8x128xf32>
    %93 = vector.shape_cast %85 : vector<8x128xf32> to vector<1x1x8x128xf32>
    tpu.vector_store %arg4[%c0_22, %c0_23, %c0_24, %c0_25], %93 {strides = array<i32>} : memref<1x2x8x128xf32, #tpu.memory_space<vmem>>, vector<1x1x8x128xf32>,
    %c0_26 = arith.constant 0 : index
    %c1_27 = arith.constant 1 : index
    %c0_28 = arith.constant 0 : index
    %c0_29 = arith.constant 0 : index
    %94 = vector.load %arg4[%c0_26, %c1_27, %c0_28, %c0_29] : memref<1x2x8x128xf32, #tpu.memory_space<vmem>>, vector<1x1x8x128xf32>
    %95 = vector.shape_cast %94 : vector<1x1x8x128xf32> to vector<8x128xf32>
    %96 = vector.shape_cast %90 : vector<8x128xf32> to vector<1x1x8x128xf32>
    tpu.vector_store %arg4[%c0_26, %c1_27, %c0_28, %c0_29], %96 {strides = array<i32>} : memref<1x2x8x128xf32, #tpu.memory_space<vmem>>, vector<1x1x8x128xf32>,
    %c0_30 = arith.constant 0 : index
    %c0_31 = arith.constant 0 : index
    %c0_32 = arith.constant 0 : index
    %c0_33 = arith.constant 0 : index
    %97 = vector.load %arg5[%c0_30, %c0_31, %c0_32, %c0_33] : memref<1x1x8x128xf32, #tpu.memory_space<vmem>>, vector<1x1x8x128xf32>
    %98 = vector.shape_cast %97 : vector<1x1x8x128xf32> to vector<8x128xf32>
    %99 = vector.shape_cast %79 : vector<8x128xf32> to vector<1x1x8x128xf32>
    tpu.vector_store %arg5[%c0_30, %c0_31, %c0_32, %c0_33], %99 {strides = array<i32>} : memref<1x1x8x128xf32, #tpu.memory_space<vmem>>, vector<1x1x8x128xf32>,
    return
  }
  func.func @transform_0(%arg0: i32, %arg1: i32) -> i32 {
    %c0_i32 = arith.constant 0 : i32
    %c0_i32_0 = arith.constant 0 : i32
    return %c0_i32 : i32
  }
  func.func @transform_1(%arg0: i32, %arg1: i32) -> (i32, i32, i32, i32) {
    %c0_i32 = arith.constant 0 : i32
    %c0_i32_0 = arith.constant 0 : i32
    %c0_i32_1 = arith.constant 0 : i32
    return %arg0, %c0_i32, %arg1, %c0_i32_0 : i32, i32, i32, i32
  }
  func.func @transform_2(%arg0: i32, %arg1: i32) -> (i32, i32, i32, i32) {
    %c0_i32 = arith.constant 0 : i32
    %c0_i32_0 = arith.constant 0 : i32
    %c0_i32_1 = arith.constant 0 : i32
    return %arg0, %c0_i32, %arg1, %c0_i32_0 : i32, i32, i32, i32
  }
  func.func @transform_3(%arg0: i32, %arg1: i32) -> (i32, i32, i32, i32) {
    %c0_i32 = arith.constant 0 : i32
    %c0_i32_0 = arith.constant 0 : i32
    %c0_i32_1 = arith.constant 0 : i32
    return %arg0, %c0_i32, %arg1, %c0_i32_0 : i32, i32, i32, i32
  }
}

</mosaic_0001>

<llo_original>
// kernel: tpu_custom_call.1
$region0: #{tpu_custom_call.1}
  #allocation0 [shape = 'u32[]', space=smem, size = 0x4, offset = 0x4, fixed_abs, tag = 'smem constant byte address 0x4 - core index']
  #allocation1 [shape = 'u32[144,128]{1,0:T(1,128)}', space=vmem, size = 0x12000, scoped, tag = 'internal scratch']
  %s0 = inlined_call_operand.hbm [shape: f32[24], index: 0, kind: input, shape index: {}]
  %s1 = inlined_call_operand.hbm [shape: f32[2,4,8,128], index: 1, kind: input, shape index: {}]
  %s2 = inlined_call_operand.hbm [shape: f32[2,2,8,128], index: 2, kind: output, shape index: {0}]
  %s3 = inlined_call_operand.hbm [shape: f32[2,1,8,128], index: 3, kind: output, shape index: {1}]
  %4 = xla_tuple %s2, %s3
  %s5 = sld [smem:[#allocation0]]
  $region57: #{tpu_custom_call.1} parent=0
    _
  %s7 = ssub.s32 1, %s5
  %s8 = scalar_select 0, %s7, %s5
  $region1: #{tpu_custom_call.1} parent=0
    #allocation2 [shape = 'u8[512]{0}', space=smem, size = 0x200, scoped, tag = 'input window, operand 0, single buffered']
    #allocation3 [shape = 's32[2]{0}', space=sflag, size = 0x8, scoped, tag = 'scoped memory for tpu_custom_call.1']
    #allocation4 [shape = 's32[2]{0}', space=sflag, size = 0x8, scoped, tag = 'scoped memory for tpu_custom_call.1']
    #allocation5 [shape = 's32[2]{0}', space=sflag, size = 0x8, scoped, tag = 'scoped memory for tpu_custom_call.1']
    #allocation6 [shape = 'u8[32768]{0}', space=vmem, size = 0x8000, scoped, tag = 'input window, operand 1']
    #allocation7 [shape = 'u8[16384]{0}', space=vmem, size = 0x4000, scoped, tag = 'output window, operand 0']
    #allocation8 [shape = 'u8[8192]{0}', space=vmem, size = 0x2000, scoped, tag = 'output window, operand 1']
    #allocation9 [shape = 's32[2]{0}', space=sflag, size = 0x8, scoped, tag = 'scoped memory for tpu_custom_call.1']
    %9 = vsyncpa [#allocation5], 0
    %10 = vsyncpa [#allocation3], 0
    %s11 = scalar_lea.sflag [#allocation3], 1
    %12 = vsyncpa %s11, 0
    %13 = vsyncpa [#allocation4], 0
    %s14 = scalar_lea.sflag [#allocation4], 1
    %15 = vsyncpa %s14, 0
    %16 = vsyncpa [#allocation9], 0
    %s17 = scalar_lea.sflag [#allocation9], 1
    %18 = vsyncpa %s17, 0
    loop: start=0, step=1, limit=4
    $region2: #{tpu_custom_call.1} parent=1 // loop_pre_header
      _
    $region3: #{tpu_custom_call.1} parent=1 // loop_header
      %s20 = sphi 0, %s24
      %p21 = scmp.ge.s32.totalorder %s20, 4
      %s27 = sphi 0, %s39
      %s28 = sphi 0, %s35
      %s29 = sphi 0, %s27
      %s30 = sphi 0, %s28
      %s31 = sphi 0, %s29
      %s32 = sphi 0, %s30
      %s40 = sphi 0, %s40
      %s42 = sphi 0, %s40
      %s43 = sphi 0, %s42
      %s57 = sphi 0, %s43
      %s65 = sphi 0, %s67
      %s68 = sphi 0, %s65
      %s69 = sphi 0, %s68
      %s85 = sphi 0, %s69
      %s93 = sphi 0, %s95
      %s96 = sphi 0, %s93
      %s97 = sphi 0, %s96
      %s113 = sphi 0, %s97
      %s121 = sphi 0, %s123
      %s124 = sphi 0, %s121
      %s125 = sphi 0, %s124
      %s141 = sphi 0, %s125
    $region4: #{tpu_custom_call.1} parent=1 // loop_header_branch
      %23 = sbr.rel (%p21) target = $region8
    $region5: #{tpu_custom_call.1} parent=1 // loop_body
      %s25 = ssub.s32 %s20, 1
      %s26 = ssub.s32 %s20, 2
      %s33 = sadd.s32 1, %s28
      %p34 = scmp.ge.s32.totalorder %s33, 1
      %s35 = scalar_select %p34, 0, %s33
      %s36 = sadd.s32 1, %s27
      %s37 = scalar_select %p34, %s36, %s27
      %p38 = scmp.ge.s32.totalorder %s37, 2
      %s39 = scalar_select %p38, 0, %s37
      %s41 = sadd.s32 %s40, 1
      %p44 = scmp.eq.s32.totalorder %s20, 1
      %p45 = scmp.ne.s32.totalorder %s40, %s42
      %p46 = scmp.eq.s32.totalorder %s20, 0
      %p47 = por %p45, %p46
      %p48 = scmp.ne.s32.totalorder %s40, %s42
      %p49 = scmp.eq.s32.totalorder %s25, 1
      %p50 = por %p48, %p49
      %p51 = scmp.ne.s32.totalorder %s42, %s43
      %p52 = scmp.eq.s32.totalorder %s25, 0
      %p53 = por %p51, %p52
      %p54 = scmp.ne.s32.totalorder %s42, %s43
      %p55 = scmp.eq.s32.totalorder %s26, 1
      %p56 = por %p54, %p55
      %p58 = scmp.ne.s32.totalorder %s43, %s57
      %p59 = scmp.eq.s32.totalorder %s26, 0
      %p60 = por %p58, %p59
      %s61 = ssub.s32 %s27, %s39
      %s62 = ssub.s32 %s28, %s35
      %s63 = sor.u32 %s61, %s62
      %p64 = scmp.eq.s32.totalorder %s63, 0
      %s66 = sadd.s32 %s65, 1
      %s67 = scalar_select %p64, %s65, %s66
      %p70 = pneg %p64
      %p71 = scmp.eq.s32.totalorder %s20, 1
      %p72 = por %p70, %p71
      %p73 = scmp.ne.s32.totalorder %s65, %s68
      %p74 = scmp.eq.s32.totalorder %s20, 0
      %p75 = por %p73, %p74
      %p76 = scmp.ne.s32.totalorder %s65, %s68
      %p77 = scmp.eq.s32.totalorder %s25, 1
      %p78 = por %p76, %p77
      %p79 = scmp.ne.s32.totalorder %s68, %s69
      %p80 = scmp.eq.s32.totalorder %s25, 0
      %p81 = por %p79, %p80
      %p82 = scmp.ne.s32.totalorder %s68, %s69
      %p83 = scmp.eq.s32.totalorder %s26, 1
      %p84 = por %p82, %p83
      %p86 = scmp.ne.s32.totalorder %s69, %s85
      %p87 = scmp.eq.s32.totalorder %s26, 0
      %p88 = por %p86, %p87
      %s89 = ssub.s32 %s27, %s39
      %s90 = ssub.s32 %s28, %s35
      %s91 = sor.u32 %s89, %s90
      %p92 = scmp.eq.s32.totalorder %s91, 0
      %s94 = sadd.s32 %s93, 1
      %s95 = scalar_select %p92, %s93, %s94
      %p98 = pneg %p92
      %p99 = scmp.eq.s32.totalorder %s20, 1
      %p100 = por %p98, %p99
      %p101 = scmp.ne.s32.totalorder %s93, %s96
      %p102 = scmp.eq.s32.totalorder %s20, 0
      %p103 = por %p101, %p102
      %p104 = scmp.ne.s32.totalorder %s93, %s96
      %p105 = scmp.eq.s32.totalorder %s25, 1
      %p106 = por %p104, %p105
      %p107 = scmp.ne.s32.totalorder %s96, %s97
      %p108 = scmp.eq.s32.totalorder %s25, 0
      %p109 = por %p107, %p108
      %p110 = scmp.ne.s32.totalorder %s96, %s97
      %p111 = scmp.eq.s32.totalorder %s26, 1
      %p112 = por %p110, %p111
      %p114 = scmp.ne.s32.totalorder %s97, %s113
      %p115 = scmp.eq.s32.totalorder %s26, 0
      %p116 = por %p114, %p115
      %s117 = ssub.s32 %s27, %s39
      %s118 = ssub.s32 %s28, %s35
      %s119 = sor.u32 %s117, %s118
      %p120 = scmp.eq.s32.totalorder %s119, 0
      %s122 = sadd.s32 %s121, 1
      %s123 = scalar_select %p120, %s121, %s122
      %p126 = pneg %p120
      %p127 = scmp.eq.s32.totalorder %s20, 1
      %p128 = por %p126, %p127
      %p129 = scmp.ne.s32.totalorder %s121, %s124
      %p130 = scmp.eq.s32.totalorder %s20, 0
      %p131 = por %p129, %p130
      %p132 = scmp.ne.s32.totalorder %s121, %s124
      %p133 = scmp.eq.s32.totalorder %s25, 1
      %p134 = por %p132, %p133
      %p135 = scmp.ne.s32.totalorder %s124, %s125
      %p136 = scmp.eq.s32.totalorder %s25, 0
      %p137 = por %p135, %p136
      %p138 = scmp.ne.s32.totalorder %s124, %s125
      %p139 = scmp.eq.s32.totalorder %s26, 1
      %p140 = por %p138, %p139
      %p142 = scmp.ne.s32.totalorder %s125, %s141
      %p143 = scmp.eq.s32.totalorder %s26, 0
      %p144 = por %p142, %p143
      %p145 = scmp.le.s32.totalorder 1, %s20
      %p146 = scmp.lt.s32.totalorder %s20, 3
      %p147 = pnand %p145, %p146
      %p148 = pneg %p147
      // Predicated region
      $region9: #{tpu_custom_call.1} parent=5 // pred_check
        _
      $region10: #{tpu_custom_call.1} parent=5 // pred_check_branch
        %150 = sbr.rel (%p147) target = $region12
      $region11: #{tpu_custom_call.1} parent=5 // pred_region
        %s151 = ssub.s32 %s20, 1
        // Predicated region
        $region13: #{tpu_custom_call.1} parent=11 // pred_check
          %p152 = pneg %p53
        $region14: #{tpu_custom_call.1} parent=11 // pred_check_branch
          %154 = sbr.rel (%p152) target = $region16
        $region15: #{tpu_custom_call.1} parent=11 // pred_region
          %s156 = ssub.s32 16, 16
          %157 = vsyncadd [#allocation5], %s156
          %160 = dma.hbm_to_smem %s0, 16, [#allocation2], [#allocation5]
        $region16: #{tpu_custom_call.1} parent=11 // pred_fallthru
          _
      $region12: #{tpu_custom_call.1} parent=5 // pred_fallthru
        _
      %p161 = scmp.lt.s32.totalorder %s20, 2
      // Predicated region
      $region17: #{tpu_custom_call.1} parent=5 // pred_check
        %p162 = pneg %p161
      $region18: #{tpu_custom_call.1} parent=5 // pred_check_branch
        %164 = sbr.rel (%p162) target = $region20
      $region19: #{tpu_custom_call.1} parent=5 // pred_region
        // Predicated region
        $region21: #{tpu_custom_call.1} parent=19 // pred_check
          %p165 = pneg %p75
        $region22: #{tpu_custom_call.1} parent=19 // pred_check_branch
          %167 = sbr.rel (%p165) target = $region24
        $region23: #{tpu_custom_call.1} parent=19 // pred_region
          %s168 = sand.u32 %s65, 1
          %s169 = scalar_lea.sflag [#allocation3], %s168
          %s170 = sand.u32 %s65, 1
          %s171 = smul.addr %s170, 32
          %s172 = scalar_lea.vmem [#allocation6], %s171
          %s174 = ssub.s32 512, 512
          %175 = vsyncadd %s169, %s174
          %s176 = smul.addr %s27, 4
          %s177 = sadd.s32 %s28, %s176
          %s178 = smul.addr %s177, 128
          %s179 = scalar_lea.hbm %s1, %s178
          %s180 = sshll.u32 %s172, 4
          %s181 = int_to_ptr.vmem [resolvable:$true] %s180
          %186 = dma.hbm_to_vmem [thread:$0]  %s179, 512, %s181, %s169, 128, 128, 8
        $region24: #{tpu_custom_call.1} parent=19 // pred_fallthru
          _
      $region20: #{tpu_custom_call.1} parent=5 // pred_fallthru
        _
      %p187 = scmp.le.s32.totalorder 1, %s20
      %p188 = scmp.lt.s32.totalorder %s20, 3
      %p189 = pnand %p187, %p188
      %p190 = pneg %p189
      // Predicated region
      $region25: #{tpu_custom_call.1} parent=5 // pred_check
        _
      $region26: #{tpu_custom_call.1} parent=5 // pred_check_branch
        %192 = sbr.rel (%p189) target = $region28
      $region27: #{tpu_custom_call.1} parent=5 // pred_region
        %s193 = ssub.s32 %s20, 1
        // Predicated region
        $region29: #{tpu_custom_call.1} parent=27 // pred_check
          %p194 = pneg %p53
        $region30: #{tpu_custom_call.1} parent=27 // pred_check_branch
          %196 = sbr.rel (%p194) target = $region32
        $region31: #{tpu_custom_call.1} parent=27 // pred_region
          %197 = dma.done [#allocation5], 16
        $region32: #{tpu_custom_call.1} parent=27 // pred_fallthru
          _
        %s198 = sand.u32 %s68, 1
        %s199 = scalar_lea.sflag [#allocation3], %s198
        %s200 = sand.u32 %s68, 1
        %s201 = smul.addr %s200, 32
        %s202 = scalar_lea.vmem [#allocation6], %s201
        // Predicated region
        $region33: #{tpu_custom_call.1} parent=27 // pred_check
          %p203 = pneg %p81
        $region34: #{tpu_custom_call.1} parent=27 // pred_check_branch
          %205 = sbr.rel (%p203) target = $region36
        $region35: #{tpu_custom_call.1} parent=27 // pred_region
          %206 = dma.done %s199, 512
        $region36: #{tpu_custom_call.1} parent=27 // pred_fallthru
          _
        %207 = sfence
        %p208 = pneg %p53
        %p209 = pneg %p50
        %s210 = sand.u32 %s68, 1
        %s211 = scalar_lea.sflag [#allocation3], %s210
        %s212 = sand.u32 %s68, 1
        %s213 = smul.addr %s212, 32
        %s214 = scalar_lea.vmem [#allocation6], %s213
        %p215 = pneg %p81
        %p216 = pneg %p78
        %p217 = pneg %p109
        %p218 = pneg %p106
        %s219 = sand.u32 %s96, 1
        %s220 = scalar_lea.sflag [#allocation4], %s219
        %s221 = sand.u32 %s96, 1
        %s222 = smul.addr %s221, 16
        %s223 = scalar_lea.vmem [#allocation7], %s222
        %p224 = pneg %p137
        %p225 = pneg %p134
        %s226 = sand.u32 %s124, 1
        %s227 = scalar_lea.sflag [#allocation9], %s226
        %s228 = sand.u32 %s124, 1
        %s229 = smul.addr %s228, 8
        %s230 = scalar_lea.vmem [#allocation8], %s229
        %s231 = smul.u32 %s29, 12
        %v232 = vld [vmem:[%s202] sm:$0xff]
        %s233 = scalar_lea.vmem %s202, 8 [#allocation6]
        %v234 = vld [vmem:[%s233] sm:$0xff]
        %s235 = scalar_lea.vmem %s202, 16 [#allocation6]
        %v236 = vld [vmem:[%s235] sm:$0xff]
        %s237 = scalar_lea.vmem %s202, 24 [#allocation6]
        %v238 = vld [vmem:[%s237] sm:$0xff]
        %s239 = sld [smem:[#allocation2 + %s231]]
        %v240 = vstv %s239
        %v241 = vmul.f32 %v240, %v232
        %s242 = sadd.s32 %s231, 1
        %s243 = sld [smem:[#allocation2 + %s242]]
        %v244 = vstv %s243
        %v245 = vmul.f32 %v244, %v234
        %v246 = vadd.f32 %v241, %v245
        %s247 = sadd.s32 %s231, 2
        %s248 = sld [smem:[#allocation2 + %s247]]
        %v249 = vstv %s248
        %v250 = vmul.f32 %v249, %v236
        %v251 = vadd.f32 %v246, %v250
        %s252 = sadd.s32 %s231, 3
        %s253 = sld [smem:[#allocation2 + %s252]]
        %v254 = vstv %s253
        %v255 = vmul.f32 %v254, %v238
        %v256 = vadd.f32 %v251, %v255
        %s257 = sadd.s32 %s231, 4
        %s258 = sld [smem:[#allocation2 + %s257]]
        %v259 = vstv %s258
        %v260 = vmul.f32 %v259, %v232
        %s261 = sadd.s32 %s231, 5
        %s262 = sld [smem:[#allocation2 + %s261]]
        %v263 = vstv %s262
        %v264 = vmul.f32 %v263, %v234
        %v265 = vadd.f32 %v260, %v264
        %s266 = sadd.s32 %s231, 6
        %s267 = sld [smem:[#allocation2 + %s266]]
        %v268 = vstv %s267
        %v269 = vmul.f32 %v268, %v236
        %v270 = vadd.f32 %v265, %v269
        %s271 = sadd.s32 %s231, 7
        %s272 = sld [smem:[#allocation2 + %s271]]
        %v273 = vstv %s272
        %v274 = vmul.f32 %v273, %v238
        %v275 = vadd.f32 %v270, %v274
        %s276 = sadd.s32 %s231, 8
        %s277 = sld [smem:[#allocation2 + %s276]]
        %v278 = vstv %s277
        %v279 = vmul.f32 %v278, %v232
        %s280 = sadd.s32 %s231, 9
        %s281 = sld [smem:[#allocation2 + %s280]]
        %v282 = vstv %s281
        %v283 = vmul.f32 %v282, %v234
        %v284 = vadd.f32 %v279, %v283
        %s285 = sadd.s32 %s231, 10
        %s286 = sld [smem:[#allocation2 + %s285]]
        %v287 = vstv %s286
        %v288 = vmul.f32 %v287, %v236
        %v289 = vadd.f32 %v284, %v288
        %s290 = sadd.s32 %s231, 11
        %s291 = sld [smem:[#allocation2 + %s290]]
        %v292 = vstv %s291
        %v293 = vmul.f32 %v292, %v238
        %v294 = vadd.f32 %v289, %v293
        %v295 = vadd.f32 %v294, 1e-07
        %v296 = vrcp.pop %v295
        %v297 = vmul.f32 %v256, %v296
        %v298 = vmul.f32 %v297, 0.13333334
        %v299 = vsub.f32 %v298, 1.0
        %v300 = vmul.f32 %v275, %v296
        %v301 = vmul.f32 %v300, 0.13333334
        %v302 = vsub.f32 %v301, 1.0
        %303 = vst [vmem:[%s223] sm:$0xff] %v299
        %s304 = scalar_lea.vmem %s223, 8 [#allocation7]
        %305 = vst [vmem:[%s304] sm:$0xff] %v302
        %306 = vst [vmem:[%s230] sm:$0xff] %v295
        %s307 = sand.u32 %s96, 1
        %s308 = scalar_lea.sflag [#allocation4], %s307
        %s309 = sand.u32 %s96, 1
        %s310 = smul.addr %s309, 16
        %s311 = scalar_lea.vmem [#allocation7], %s310
        %s312 = sand.u32 %s124, 1
        %s313 = scalar_lea.sflag [#allocation9], %s312
        %s314 = sand.u32 %s124, 1
        %s315 = smul.addr %s314, 8
        %s316 = scalar_lea.vmem [#allocation8], %s315
        // Predicated region
        $region37: #{tpu_custom_call.1} parent=27 // pred_check
          %p317 = pneg %p106
        $region38: #{tpu_custom_call.1} parent=27 // pred_check_branch
          %319 = sbr.rel (%p317) target = $region40
        $region39: #{tpu_custom_call.1} parent=27 // pred_region
          %s321 = ssub.s32 256, 256
          %322 = vsyncadd %s308, %s321
          %s323 = smul.addr %s29, 2
          %s324 = sadd.s32 %s30, %s323
          %s325 = smul.addr %s324, 128
          %s326 = scalar_lea.hbm %s2, %s325
          %s327 = sshll.u32 %s311, 4
          %s328 = int_to_ptr.vmem [resolvable:$true] %s327
          %333 = dma.vmem_to_hbm [thread:$0]  %s328, 256, %s326, %s308, 128, 128, 8
        $region40: #{tpu_custom_call.1} parent=27 // pred_fallthru
          _
        // Predicated region
        $region41: #{tpu_custom_call.1} parent=27 // pred_check
          %p334 = pneg %p134
        $region42: #{tpu_custom_call.1} parent=27 // pred_check_branch
          %336 = sbr.rel (%p334) target = $region44
        $region43: #{tpu_custom_call.1} parent=27 // pred_region
          %s338 = ssub.s32 128, 128
          %339 = vsyncadd %s313, %s338
          %s340 = sadd.s32 %s30, %s29
          %s341 = smul.addr %s340, 128
          %s342 = scalar_lea.hbm %s3, %s341
          %s344 = sshll.u32 %s316, 4
          %s345 = int_to_ptr.vmem [resolvable:$true] %s344
          %347 = dma.vmem_to_hbm [thread:$0]  %s345, 128, %s342, %s313
        $region44: #{tpu_custom_call.1} parent=27 // pred_fallthru
          _
      $region28: #{tpu_custom_call.1} parent=5 // pred_fallthru
        _
      %p348 = scmp.le.s32.totalorder 2, %s20
      // Predicated region
      $region45: #{tpu_custom_call.1} parent=5 // pred_check
        %p349 = pneg %p348
      $region46: #{tpu_custom_call.1} parent=5 // pred_check_branch
        %351 = sbr.rel (%p349) target = $region48
      $region47: #{tpu_custom_call.1} parent=5 // pred_region
        %s352 = ssub.s32 %s20, 2
        // Predicated region
        $region49: #{tpu_custom_call.1} parent=47 // pred_check
          %p353 = pneg %p112
        $region50: #{tpu_custom_call.1} parent=47 // pred_check_branch
          %355 = sbr.rel (%p353) target = $region52
        $region51: #{tpu_custom_call.1} parent=47 // pred_region
          %s356 = sand.u32 %s97, 1
          %s357 = scalar_lea.sflag [#allocation4], %s356
          %s358 = sand.u32 %s97, 1
          %s359 = smul.addr %s358, 16
          %s360 = scalar_lea.vmem [#allocation7], %s359
          %361 = dma.done %s357, 256
        $region52: #{tpu_custom_call.1} parent=47 // pred_fallthru
          _
        // Predicated region
        $region53: #{tpu_custom_call.1} parent=47 // pred_check
          %p362 = pneg %p140
        $region54: #{tpu_custom_call.1} parent=47 // pred_check_branch
          %364 = sbr.rel (%p362) target = $region56
        $region55: #{tpu_custom_call.1} parent=47 // pred_region
          %s365 = sand.u32 %s125, 1
          %s366 = scalar_lea.sflag [#allocation9], %s365
          %s367 = sand.u32 %s125, 1
          %s368 = smul.addr %s367, 8
          %s369 = scalar_lea.vmem [#allocation8], %s368
          %370 = dma.done %s366, 128
        $region56: #{tpu_custom_call.1} parent=47 // pred_fallthru
          _
      $region48: #{tpu_custom_call.1} parent=5 // pred_fallthru
        _
    $region6: #{tpu_custom_call.1} parent=1 // loop_footer
      %s24 = sadd.s32 1, %s20
    $region7: #{tpu_custom_call.1} parent=1 // loop_footer_branch
      %19 = sbr.rel target = $region3
    $region8: #{tpu_custom_call.1} parent=1 // loop_exit
      _
    %371 = vsyncpa [#allocation3], 1
    %s372 = scalar_lea.sflag [#allocation3], 1
    %373 = vsyncpa %s372, 1
    %374 = vsyncpa [#allocation4], 1
    %s375 = scalar_lea.sflag [#allocation4], 1
    %376 = vsyncpa %s375, 1
    %377 = vsyncpa [#allocation9], 1
    %s378 = scalar_lea.sflag [#allocation9], 1
    %379 = vsyncpa %s378, 1
    %380 = vsyncpa [#allocation5], 1
    %s381 = scalar_lea.sflag [#allocation5], 1
    %382 = vsyncpa %s381, 1

</llo_original>
